<compile_context>
chip_gen: v7x
topology: tpu7x:2x2x1
jax: 0.10.0
libtpu: 0.0.40
codegen_flags: <defaults>
</compile_context>

<pallas_src>
import jax
import jax.numpy as jnp
from jax.experimental import pallas as pl
from jax.experimental.pallas import tpu as pltpu

# ---- problem sizes (small, consistent with the module) ----
B, S, D = 2, 8, 32            # batch, seq, model dim
FF_MULT = 2
HID = D * FF_MULT             # hidden dim (64); fused w1 output = 2*HID = 128
ROW_TILE = 256                # rows per grid step at scale (clamped to B*S here)


def _mish(x):
    # mish(x) = x * tanh(softplus(x)) = x * (t^2 + 2t) / (t^2 + 2t + 2), t = e^x.
    # 2 EUP ops (exp, divide) instead of 3 (exp, log1p, tanh).  Clamp before the
    # exp so the unselected branch of the where stays finite; for x >= 20,
    # tanh(softplus(x)) == 1 in f32 so mish(x) == x exactly.
    xc = jnp.minimum(x, 20.0)
    t = jnp.exp(xc)
    p = t * (t + 2.0)
    y = x * (p / (p + 2.0))
    return jnp.where(x >= 20.0, x, y)


def ff_kernel(x_ref, w1_ref, w2p_ref, o_ref):
    hid2 = w1_ref.shape[-1]          # 2*HID = 128
    hid = hid2 // 2

    x = x_ref[...]                                                     # (T, D)
    # Single fused, lane-dense first GEMM: (T, D) @ (D, 2*HID).
    u = jnp.dot(x, w1_ref[...], preferred_element_type=jnp.float32)    # (T, 128)

    # Swap the two halves on the XLU so `gate` sits over the `act` lanes.
    g = pltpu.roll(u, shift=hid, axis=1)

    # Lanes [0, HID): mish(act) * gate  (the payload).
    # Lanes [HID, 2*HID): garbage (mish(gate)*act); zero it so the zero rows of
    # w2p can never be hit by inf * 0.
    lane = jax.lax.broadcasted_iota(jnp.int32, u.shape, dimension=1)
    h = jnp.where(lane < hid, _mish(u) * g, 0.0)                        # (T, 128)

    # Second GEMM against zero-padded w2 (2*HID, D): K stays 128-dense, no
    # in-kernel lane slicing of h.
    o_ref[...] = jnp.dot(h, w2p_ref[...], preferred_element_type=jnp.float32)


def feedforward(x, w1, w2, *, row_tile=ROW_TILE):
    """FeedForward forward pass.

    x : (B, S, D) float32
    w1: (D, 2*HID) float32   -- (in, out) layout, i.e. nn.Linear.w1.weight.T
    w2: (HID, D)  float32    -- (in, out) layout, i.e. nn.Linear.w2.weight.T
    """
    b, s, d = x.shape
    hid = w2.shape[0]
    rows = b * s
    xr = x.reshape(rows, d)

    # Row tile: multiple of 8 sublanes, clamped to the problem size.
    tile = min(row_tile, rows)
    tile = max(8, (tile // 8) * 8)
    padded = pl.cdiv(rows, tile) * tile
    if padded != rows:
        xr = jnp.pad(xr, ((0, padded - rows), (0, 0)))

    # Zero-pad w2 to (2*HID, D): rows [HID, 2*HID) multiply the (zeroed) garbage
    # half of the fused intermediate.
    w2p = jnp.concatenate([w2, jnp.zeros((hid, d), w2.dtype)], axis=0)

    out = pl.pallas_call(
        ff_kernel,
        out_shape=jax.ShapeDtypeStruct((padded, d), jnp.float32),
        grid=(padded // tile,),
        in_specs=[
            pl.BlockSpec((tile, d), lambda i: (i, 0)),       # x row tile
            pl.BlockSpec((d, 2 * hid), lambda i: (0, 0)),    # fused w1 (VMEM-resident)
            pl.BlockSpec((2 * hid, d), lambda i: (0, 0)),    # zero-padded w2
        ],
        out_specs=pl.BlockSpec((tile, d), lambda i: (i, 0)),
        compiler_params=pltpu.CompilerParams(
            dimension_semantics=("parallel",)),
    )(xr, w1, w2p)

    return out[:rows].reshape(b, s, d)


def reference(x, w1, w2):
    """Pure-JAX mirror of the PyTorch forward for verification."""
    u = x @ w1
    a, gate = jnp.split(u, 2, axis=-1)
    return (a * jnp.tanh(jax.nn.softplus(a)) * gate) @ w2


def make_params(key):
    k1, k2 = jax.random.split(key, 2)
    scale = 0.05
    w1 = jax.random.normal(k1, (D, 2 * HID), jnp.float32) * scale  # (in, out)
    w2 = jax.random.normal(k2, (HID, D), jnp.float32) * scale      # (in, out)
    return w1, w2


if __name__ == "__main__":
    key = jax.random.PRNGKey(0)
    k_x, k_p = jax.random.split(key, 2)
    x = jax.random.normal(k_x, (B, S, D), jnp.float32)
    w1, w2 = make_params(k_p)

    out = jax.block_until_ready(feedforward(x, w1, w2))
    ref = jax.block_until_ready(reference(x, w1, w2))

    assert out.shape == (B, S, D)
    err = float(jnp.max(jnp.abs(out - ref)))
    assert jnp.allclose(out, ref, atol=1e-4, rtol=1e-4), err
    print("KERNEL_OK")
</pallas_src>

<mosaic_0001>
module attributes {stable_mosaic.version = 11 : i64} {
  func.func @ff_kernel(%arg0: i32, %arg1: memref<16x32xf32, #tpu.memory_space<vmem>>, %arg2: memref<32x128xf32, #tpu.memory_space<vmem>>, %arg3: memref<128x32xf32, #tpu.memory_space<vmem>>, %arg4: memref<16x32xf32, #tpu.memory_space<vmem>>) attributes {dimension_semantics = [#tpu.dimension_semantics<parallel>], iteration_bounds = array<i64: 1>, scalar_prefetch = 0 : i64, scratch_operands = 0 : i64, tpu.core_type = #tpu.core_type<tc>, window_params = [{transform_indices = @transform_0, window_bounds = array<i64: 16, 32>}, {pipeline_mode = #tpu.pipeline_mode<synchronous>, transform_indices = @transform_1, window_bounds = array<i64: 32, 128>}, {pipeline_mode = #tpu.pipeline_mode<synchronous>, transform_indices = @transform_2, window_bounds = array<i64: 128, 32>}, {transform_indices = @transform_3, window_bounds = array<i64: 16, 32>}]} {
    %c0 = arith.constant 0 : index
    %c0_0 = arith.constant 0 : index
    %0 = vector.load %arg1[%c0, %c0_0] : memref<16x32xf32, #tpu.memory_space<vmem>>, vector<16x32xf32>
    %c0_1 = arith.constant 0 : index
    %c0_2 = arith.constant 0 : index
    %1 = vector.load %arg2[%c0_1, %c0_2] : memref<32x128xf32, #tpu.memory_space<vmem>>, vector<32x128xf32>
    %cst = arith.constant dense<0.000000e+00> : vector<16x128xf32>
    %2 = tpu.matmul %0, %1, %cst {dimension_numbers = #tpu.dot_dimension_numbers<[1], [0], [0], [1], [0, 0, 1, 1], [], []>} : vector<16x32xf32>, vector<32x128xf32>, vector<16x128xf32> -> vector<16x128xf32>
    %c64_i32 = arith.constant 64 : i32
    %3 = tpu.dynamic_rotate %2 by %c64_i32 dim 1 : vector<16x128xf32>, i32 -> vector<16x128xf32>
    %4 = tpu.iota {dimensions = array<i32: 1>} : vector<16x128xi32>
    %c64_i32_3 = arith.constant 64 : i32
    %5 = vector.broadcast %c64_i32_3 : i32 to vector<16x128xi32>
    %6 = arith.cmpi slt, %4, %5 : vector<16x128xi32>
    %cst_4 = arith.constant 2.000000e+01 : f32
    %7 = vector.broadcast %cst_4 : f32 to vector<16x128xf32>
    %8 = arith.minimumf %2, %7 : vector<16x128xf32>
    %9 = math.exp %8 : vector<16x128xf32>
    %cst_5 = arith.constant 2.000000e+00 : f32
    %10 = vector.broadcast %cst_5 : f32 to vector<16x128xf32>
    %11 = arith.addf %9, %10 : vector<16x128xf32>
    %12 = arith.mulf %9, %11 : vector<16x128xf32>
    %cst_6 = arith.constant 2.000000e+00 : f32
    %13 = vector.broadcast %cst_6 : f32 to vector<16x128xf32>
    %14 = arith.addf %12, %13 : vector<16x128xf32>
    %15 = arith.divf %12, %14 : vector<16x128xf32>
    %16 = arith.mulf %2, %15 : vector<16x128xf32>
    %cst_7 = arith.constant 2.000000e+01 : f32
    %17 = vector.broadcast %cst_7 : f32 to vector<16x128xf32>
    %18 = arith.cmpf oge, %2, %17 : vector<16x128xf32>
    %19 = arith.select %18, %2, %16 : vector<16x128xi1>, vector<16x128xf32>
    %20 = arith.mulf %19, %3 : vector<16x128xf32>
    %cst_8 = arith.constant 0.000000e+00 : f32
    %21 = vector.broadcast %cst_8 : f32 to vector<16x128xf32>
    %22 = arith.select %6, %20, %21 : vector<16x128xi1>, vector<16x128xf32>
    %c0_9 = arith.constant 0 : index
    %c0_10 = arith.constant 0 : index
    %23 = vector.load %arg3[%c0_9, %c0_10] : memref<128x32xf32, #tpu.memory_space<vmem>>, vector<128x32xf32>
    %cst_11 = arith.constant dense<0.000000e+00> : vector<16x32xf32>
    %24 = tpu.matmul %22, %23, %cst_11 {dimension_numbers = #tpu.dot_dimension_numbers<[1], [0], [0], [1], [0, 0, 1, 1], [], []>} : vector<16x128xf32>, vector<128x32xf32>, vector<16x32xf32> -> vector<16x32xf32>
    %c0_12 = arith.constant 0 : index
    %c0_13 = arith.constant 0 : index
    %25 = vector.load %arg4[%c0_12, %c0_13] : memref<16x32xf32, #tpu.memory_space<vmem>>, vector<16x32xf32>
    tpu.vector_store %arg4[%c0_12, %c0_13], %24 {strides = array<i32>} : memref<16x32xf32, #tpu.memory_space<vmem>>, vector<16x32xf32>,
    return
  }
  func.func @transform_0(%arg0: i32) -> (i32, i32) {
    %c0_i32 = arith.constant 0 : i32
    %c0_i32_0 = arith.constant 0 : i32
    return %arg0, %c0_i32 : i32, i32
  }
  func.func @transform_1(%arg0: i32) -> (i32, i32) {
    %c0_i32 = arith.constant 0 : i32
    %c0_i32_0 = arith.constant 0 : i32
    %c0_i32_1 = arith.constant 0 : i32
    return %c0_i32, %c0_i32_0 : i32, i32
  }
  func.func @transform_2(%arg0: i32) -> (i32, i32) {
    %c0_i32 = arith.constant 0 : i32
    %c0_i32_0 = arith.constant 0 : i32
    %c0_i32_1 = arith.constant 0 : i32
    return %c0_i32, %c0_i32_0 : i32, i32
  }
  func.func @transform_3(%arg0: i32) -> (i32, i32) {
    %c0_i32 = arith.constant 0 : i32
    %c0_i32_0 = arith.constant 0 : i32
    return %arg0, %c0_i32 : i32, i32
  }
}

</mosaic_0001>

<llo_original>
// kernel: tpu_custom_call.1
$region0: #{tpu_custom_call.1}
  #allocation0 [shape = 'u32[]', space=smem, size = 0x4, offset = 0x4, fixed_abs, tag = 'smem constant byte address 0x4 - core index']
  #allocation1 [shape = 'u32[144,128]{1,0:T(1,128)}', space=vmem, size = 0x12000, scoped, tag = 'internal scratch']
  %s0 = inlined_call_operand.vmem [shape: f32[16,32], index: 0, kind: input, shape index: {}]
  %s1 = inlined_call_operand.vmem [shape: f32[32,128], index: 1, kind: input, shape index: {}]
  %s2 = inlined_call_operand.vmem [shape: f32[128,32], index: 2, kind: input, shape index: {}]
  %s3 = inlined_call_operand.hbm [shape: f32[16,32], index: 3, kind: output, shape index: {}]
  %s4 = sld [smem:[#allocation0]]
  $region22: #{tpu_custom_call.1} parent=0
    _
  %s6 = ssub.s32 1, %s4
  %s7 = scalar_select 0, %s6, %s4
  $region1: #{tpu_custom_call.1} parent=0
    #allocation2 [shape = 'u8[8192]{0}', space=vmem, size = 0x2000, scoped, tag = 'output window, operand 0, single buffered']
    #allocation3 [shape = 's32[1]{0}', space=sflag, size = 0x4, scoped, tag = 'scoped memory for tpu_custom_call.1']
    %8 = vsyncpa [#allocation3], 0
    // Predicated region
    $region2: #{tpu_custom_call.1} parent=1 // pred_check
      _
    $region3: #{tpu_custom_call.1} parent=1 // pred_check_branch
      %10 = sbr.rel (0) target = $region5
    $region4: #{tpu_custom_call.1} parent=1 // pred_region
      _
    $region5: #{tpu_custom_call.1} parent=1 // pred_fallthru
      _
    // Predicated region
    $region6: #{tpu_custom_call.1} parent=1 // pred_check
      _
    $region7: #{tpu_custom_call.1} parent=1 // pred_check_branch
      %12 = sbr.rel (0) target = $region9
    $region8: #{tpu_custom_call.1} parent=1 // pred_region
      _
    $region9: #{tpu_custom_call.1} parent=1 // pred_fallthru
      _
    // Predicated region
    $region10: #{tpu_custom_call.1} parent=1 // pred_check
      _
    $region11: #{tpu_custom_call.1} parent=1 // pred_check_branch
      %14 = sbr.rel (0) target = $region13
    $region12: #{tpu_custom_call.1} parent=1 // pred_region
      _
    $region13: #{tpu_custom_call.1} parent=1 // pred_fallthru
      _
    %v15 = vld [vmem:[%s0] sm:$0xff]
    %v16 = vld [vmem:[%s0 + $0x8] sm:$0xff]
    %v17 = vld [vmem:[%s1] sm:$0xff]
    %v18 = vld [vmem:[%s1 + $0x8] sm:$0xff]
    %v19 = vld [vmem:[%s1 + $0x10] sm:$0xff]
    %v20 = vld [vmem:[%s1 + $0x18] sm:$0xff]
    %vm21 = vcmask 261120
    %v23 = vsel %vm21, %v15, 0
    %v26 = vsel %vm21, %v16, 0
    %28 = vmatprep.subr.mxu0 0.0
    %29 = vmatpush1.msra.mxu0 %v17
    %30 = vmatprep.subr.mxu0 0.0
    %31 = vmatpush1.msra.mxu0 %v18
    %32 = vmatprep.subr.mxu0 0.0
    %33 = vmatpush1.msra.mxu0 %v19
    %34 = vmatprep.subr.mxu0 0.0
    %35 = vmatpush1.msra.mxu0 %v20
    %36 = vmatprep.subr.mxu0 0.0
    %37 = vmatpush1.msra.mxu0 0.0
    %38 = vmatprep.subr.mxu0 0.0
    %39 = vmatpush1.msra.mxu0 0.0
    %40 = vmatprep.subr.mxu0 0.0
    %41 = vmatpush1.msra.mxu0 0.0
    %42 = vmatprep.subr.mxu0 0.0
    %43 = vmatpush1.msra.mxu0 0.0
    %44 = vmatprep.subr.mxu0 0.0
    %45 = vmatpush1.msra.mxu0 0.0
    %46 = vmatprep.subr.mxu0 0.0
    %47 = vmatpush1.msra.mxu0 0.0
    %48 = vmatprep.subr.mxu0 0.0
    %49 = vmatpush1.msra.mxu0 0.0
    %50 = vmatprep.subr.mxu0 0.0
    %51 = vmatpush1.msra.mxu0 0.0
    %52 = vmatprep.subr.mxu0 0.0
    %53 = vmatpush1.msra.mxu0 0.0
    %54 = vmatprep.subr.mxu0 0.0
    %55 = vmatpush1.msra.mxu0 0.0
    %56 = vmatprep.subr.mxu0 0.0
    %57 = vmatpush1.msra.mxu0 0.0
    %58 = vmatprep.subr.mxu0 0.0
    %59 = vmatpush1.msra.mxu0 0.0
    %60 = vmatprep.subr.mxu0 0.0
    %61 = vmatpush1.msra.mxu0 0.0
    %62 = vmatprep.subr.mxu0 0.0
    %63 = vmatpush1.msra.mxu0 0.0
    %64 = vmatprep.subr.mxu0 0.0
    %65 = vmatpush1.msra.mxu0 0.0
    %66 = vmatprep.subr.mxu0 0.0
    %67 = vmatpush1.msra.mxu0 0.0
    %68 = vmatprep.subr.mxu0 0.0
    %69 = vmatpush1.msra.mxu0 0.0
    %70 = vmatprep.subr.mxu0 0.0
    %71 = vmatpush1.msra.mxu0 0.0
    %72 = vmatprep.subr.mxu0 0.0
    %73 = vmatpush1.msra.mxu0 0.0
    %74 = vmatprep.subr.mxu0 0.0
    %75 = vmatpush1.msra.mxu0 0.0
    %76 = vmatprep.subr.mxu0 0.0
    %77 = vmatpush1.msra.mxu0 0.0
    %78 = vmatprep.subr.mxu0 0.0
    %79 = vmatpush1.msra.mxu0 0.0
    %80 = vmatprep.subr.mxu0 0.0
    %81 = vmatpush1.msra.mxu0 0.0
    %82 = vmatprep.subr.mxu0 0.0
    %83 = vmatpush1.msra.mxu0 0.0
    %84 = vmatprep.subr.mxu0 0.0
    %85 = vmatpush1.msra.mxu0 0.0
    %86 = vmatprep.subr.mxu0 0.0
    %87 = vmatpush1.msra.mxu0 0.0
    %88 = vmatprep.subr.mxu0 0.0
    %89 = vmatpush1.msra.mxu0 0.0
    %90 = vmatprep.subr.mxu0 0.0
    %91 = vmatpush1.msra.mxu0 0.0
    %92 = vmatprep.mubr.f32.mxu0 0.0
    %93 = vmatmul.mubr.f32.gmra.mrb[0].mxu0 %v23
    %v94 = vpop.f32.mrb[0].mxu0
    %v95 = vadd.f32 0.0, %v94
    %v96 = vpop.f32.mrb[0].mxu0
    %97 = vmatprep.mubr.f32.mxu0 0.0
    %98 = vmatmul.mubr.f32.gmra.mrb[0].mxu0 %v26
    %v99 = vpop.f32.mrb[0].mxu0
    %v100 = vadd.f32 0.0, %v99
    %v101 = vpop.f32.mrb[0].mxu0
    %102 = vdwg.mxu0
    %103 = vrot.lane.b32.xlu0 %v95, 64
    %v104 = vpop.permute.xlu0 %103
    %105 = vrot.lane.b32.xlu0 %v100, 64
    %v106 = vpop.permute.xlu0 %105
    %v107 = vlaneseq
    %v108 = vand.u32 %v107, 127
    %vm109 = vcmp.lt.s32.totalorder %v108, 64
    %v110 = vmin.f32 %v95, 20.0
    %v111 = vmin.f32 %v100, 20.0
    %v112 = vmul.f32 %v110, 1.442695
    %v113 = vpow.pop %v112
    %v114 = vmul.f32 %v111, 1.442695
    %v115 = vpow.pop %v114
    %v116 = vadd.f32 %v113, 2.0
    %v117 = vadd.f32 %v115, 2.0
    %v118 = vmul.f32 %v113, %v116
    %v119 = vmul.f32 %v115, %v117
    %v120 = vadd.f32 %v118, 2.0
    %v121 = vadd.f32 %v119, 2.0
    %v122 = vrcp.pop %v120
    %v123 = vmul.f32 %v118, %v122
    %v124 = vrcp.pop %v121
    %v125 = vmul.f32 %v119, %v124
    %v126 = vmul.f32 %v95, %v123
    %v127 = vmul.f32 %v100, %v125
    %vm128 = vcmp.ge.f32.partialorder %v95, 20.0
    %vm129 = vcmp.ge.f32.partialorder %v100, 20.0
    %v130 = vsel %vm128, %v95, %v126
    %v131 = vsel %vm129, %v100, %v127
    %v132 = vmul.f32 %v130, %v104
    %v133 = vmul.f32 %v131, %v106
    %v134 = vsel %vm109, %v132, 0.0
    %v135 = vsel %vm109, %v133, 0.0
    %v136 = vld [vmem:[%s2] sm:$0xff]
    %v137 = vld [vmem:[%s2 + $0x8] sm:$0xff]
    %v138 = vld [vmem:[%s2 + $0x10] sm:$0xff]
    %v139 = vld [vmem:[%s2 + $0x18] sm:$0xff]
    %v140 = vld [vmem:[%s2 + $0x20] sm:$0xff]
    %v141 = vld [vmem:[%s2 + $0x28] sm:$0xff]
    %v142 = vld [vmem:[%s2 + $0x30] sm:$0xff]
    %v143 = vld [vmem:[%s2 + $0x38] sm:$0xff]
    %v144 = vld [vmem:[%s2 + $0x40] sm:$0xff]
    %v145 = vld [vmem:[%s2 + $0x48] sm:$0xff]
    %v146 = vld [vmem:[%s2 + $0x50] sm:$0xff]
    %v147 = vld [vmem:[%s2 + $0x58] sm:$0xff]
    %v148 = vld [vmem:[%s2 + $0x60] sm:$0xff]
    %v149 = vld [vmem:[%s2 + $0x68] sm:$0xff]
    %v150 = vld [vmem:[%s2 + $0x70] sm:$0xff]
    %v151 = vld [vmem:[%s2 + $0x78] sm:$0xff]
    %152 = vmatprep.subr.mxu0 0.0
    %153 = vmatpush1.msra.mxu0 %v136
    %154 = vmatprep.subr.mxu0 0.0
    %155 = vmatpush1.msra.mxu0 %v137
    %156 = vmatprep.subr.mxu0 0.0
    %157 = vmatpush1.msra.mxu0 %v138
    %158 = vmatprep.subr.mxu0 0.0
    %159 = vmatpush1.msra.mxu0 %v139
    %160 = vmatprep.subr.mxu0 0.0
    %161 = vmatpush1.msra.mxu0 %v140
    %162 = vmatprep.subr.mxu0 0.0
    %163 = vmatpush1.msra.mxu0 %v141
    %164 = vmatprep.subr.mxu0 0.0
    %165 = vmatpush1.msra.mxu0 %v142
    %166 = vmatprep.subr.mxu0 0.0
    %167 = vmatpush1.msra.mxu0 %v143
    %168 = vmatprep.subr.mxu0 0.0
    %169 = vmatpush1.msra.mxu0 %v144
    %170 = vmatprep.subr.mxu0 0.0
    %171 = vmatpush1.msra.mxu0 %v145
    %172 = vmatprep.subr.mxu0 0.0
    %173 = vmatpush1.msra.mxu0 %v146
    %174 = vmatprep.subr.mxu0 0.0
    %175 = vmatpush1.msra.mxu0 %v147
    %176 = vmatprep.subr.mxu0 0.0
    %177 = vmatpush1.msra.mxu0 %v148
    %178 = vmatprep.subr.mxu0 0.0
    %179 = vmatpush1.msra.mxu0 %v149
    %180 = vmatprep.subr.mxu0 0.0
    %181 = vmatpush1.msra.mxu0 %v150
    %182 = vmatprep.subr.mxu0 0.0
    %183 = vmatpush1.msra.mxu0 %v151
    %184 = vmatprep.subr.mxu0 0.0
    %185 = vmatpush1.msra.mxu0 0.0
    %186 = vmatprep.subr.mxu0 0.0
    %187 = vmatpush1.msra.mxu0 0.0
    %188 = vmatprep.subr.mxu0 0.0
    %189 = vmatpush1.msra.mxu0 0.0
    %190 = vmatprep.subr.mxu0 0.0
    %191 = vmatpush1.msra.mxu0 0.0
    %192 = vmatprep.subr.mxu0 0.0
    %193 = vmatpush1.msra.mxu0 0.0
    %194 = vmatprep.subr.mxu0 0.0
    %195 = vmatpush1.msra.mxu0 0.0
    %196 = vmatprep.subr.mxu0 0.0
    %197 = vmatpush1.msra.mxu0 0.0
    %198 = vmatprep.subr.mxu0 0.0
    %199 = vmatpush1.msra.mxu0 0.0
    %200 = vmatprep.subr.mxu0 0.0
    %201 = vmatpush1.msra.mxu0 0.0
    %202 = vmatprep.subr.mxu0 0.0
    %203 = vmatpush1.msra.mxu0 0.0
    %204 = vmatprep.subr.mxu0 0.0
    %205 = vmatpush1.msra.mxu0 0.0
    %206 = vmatprep.subr.mxu0 0.0
    %207 = vmatpush1.msra.mxu0 0.0
    %208 = vmatprep.subr.mxu0 0.0
    %209 = vmatpush1.msra.mxu0 0.0
    %210 = vmatprep.subr.mxu0 0.0
    %211 = vmatpush1.msra.mxu0 0.0
    %212 = vmatprep.subr.mxu0 0.0
    %213 = vmatpush1.msra.mxu0 0.0
    %214 = vmatprep.subr.mxu0 0.0
    %215 = vmatpush1.msra.mxu0 0.0
    %216 = vmatprep.mubr.f32.mxu0 0.0
    %217 = vmatmul.mubr.f32.gmra.mrb[0].mxu0 %v134
    %v218 = vpop.f32.mrb[0].mxu0
    %v219 = vadd.f32 0.0, %v218
    %v220 = vpop.f32.mrb[0].mxu0
    %221 = vmatprep.mubr.f32.mxu0 0.0
    %222 = vmatmul.mubr.f32.gmra.mrb[0].mxu0 %v135
    %v223 = vpop.f32.mrb[0].mxu0
    %v224 = vadd.f32 0.0, %v223
    %v225 = vpop.f32.mrb[0].mxu0
    %226 = vdwg.mxu0
    %227 = vst.msk [vmem:[#allocation2] sm:$0xff] %vm21, %v219
    %228 = vst.msk [vmem:[#allocation2 + $0x8] sm:$0xff] %vm21, %v224
    // Predicated region
    $region14: #{tpu_custom_call.1} parent=1 // pred_check
      _
    $region15: #{tpu_custom_call.1} parent=1 // pred_check_branch
      %230 = sbr.rel (0) target = $region17
    $region16: #{tpu_custom_call.1} parent=1 // pred_region
      %s232 = ssub.s32 256, 256
      %233 = vsyncadd [#allocation3], %s232
      %s234 = sshll.u32 [#allocation2], 4
      %s235 = int_to_ptr.vmem [resolvable:$true] %s234
      %240 = dma.vmem_to_hbm [thread:$0]  %s235, 256, %s3, [#allocation3], 128, 128, 8
    $region17: #{tpu_custom_call.1} parent=1 // pred_fallthru
      _
    // Predicated region
    $region18: #{tpu_custom_call.1} parent=1 // pred_check
      _
    $region19: #{tpu_custom_call.1} parent=1 // pred_check_branch
      %242 = sbr.rel (0) target = $region21
    $region20: #{tpu_custom_call.1} parent=1 // pred_region
      %243 = dma.done [#allocation3], 256
    $region21: #{tpu_custom_call.1} parent=1 // pred_fallthru
      _
    %244 = vsyncpa [#allocation3], 1

</llo_original>
